<compile_context>
chip_gen: v7x
topology: tpu7x:2x2x1
jax: 0.10.0
libtpu: 0.0.40
codegen_flags: <defaults>
</compile_context>

<pallas_src>
import jax
import jax.numpy as jnp
from jax.experimental import pallas as pl
from jax.experimental.pallas import tpu as pltpu


def _downsample_kernel(r0e, r0o, r1e, r1o, r2e, r2o, w_ref, b_ref, o_ref):
    """One (batch, cout-tile, row-tile) grid step.

    r{kh}e : [1, T, Wo+1, C] bf16  even-column phase of padded-row set kh
    r{kh}o : [1, T, Wo,   C] bf16  odd-column  phase of padded-row set kh
    w_ref  : [9*C, TILE_CO]  bf16  rows ordered (kh*3 + kw)*C + cin
    b_ref  : [1, TILE_CO]    f32
    o_ref  : [1, TILE_CO, T*Wo]    channel-major (NCHW-compatible) output tile
    """
    taps = []
    for ce_ref, co_ref in ((r0e, r0o), (r1e, r1o), (r2e, r2o)):
        ce = ce_ref[0]                       # [T, Wo+1, C]
        co = co_ref[0]                       # [T, Wo,   C]
        taps.append(ce[:, :-1, :])           # kw = 0  (padded col 2*wo)
        taps.append(co)                      # kw = 1  (padded col 2*wo + 1)
        taps.append(ce[:, 1:, :])            # kw = 2  (padded col 2*wo + 2)
    t = jnp.concatenate(taps, axis=-1)       # [T, Wo, 9C]  (tap-major, cin-minor)
    tt, wo, k = t.shape
    t2 = t.reshape(tt * wo, k)               # [P_t, 9C]
    acc = jnp.dot(t2, w_ref[...], preferred_element_type=jnp.float32)  # [P_t, CO_t]
    acc = acc + b_ref[...]                   # bias broadcast over P_t (f32)
    # Transposed store: channel-major output -> lane-dense when P_t >= 128 and
    # no wrapper-side NHWC->NCHW transpose is needed.
    o_ref[0] = jnp.transpose(acc, (1, 0)).astype(o_ref.dtype)


def _choose_tiles(B, C, Ho, Wo, in_bytes, out_bytes, budget):
    """Pick (TILE_CO, TILE_HO) under a VMEM budget + per-step-overhead target."""
    K = 9 * C

    def footprint(tco, rows):
        fixed = 2 * K * tco * in_bytes + 2 * tco * 4           # weights(x2) + bias
        per_row = (2 * (3 * (Wo + 1) + 3 * Wo) * C * in_bytes  # 6 phase blocks (x2 bufs)
                   + Wo * K * in_bytes                          # in-VMEM taps concat
                   + 2 * Wo * tco * 4                           # f32 acc + transpose
                   + 2 * Wo * tco * out_bytes)                  # output block (x2 bufs)
        return fixed + rows * per_row

    # --- Cout tiling: keep the double-buffered weight block well under budget ---
    tile_co = C
    if footprint(tile_co, 0) > budget // 3:
        for cand in (1024, 768, 512, 384, 256, 128):
            if C % cand == 0 and footprint(cand, 0) <= budget // 3:
                tile_co = cand
                break
        else:
            if C % 128 == 0:
                tile_co = 128
    n_co = C // tile_co

    # --- row tiling: legal tiles keep the flattened-P output block 128-aligned ---
    legal = [t for t in range(1, Ho + 1)
             if Ho % t == 0 and (t == Ho or (t * Wo) % 128 == 0)]
    per_row = footprint(tile_co, 1) - footprint(tile_co, 0)
    rows_fit = max(1, (budget - footprint(tile_co, 0)) // per_row)
    target_p = 2048 if C <= 256 else (1024 if C <= 512 else 512)
    want = min(Ho, rows_fit, max(1, target_p // max(Wo, 1)))
    fit = [t for t in legal if t <= want]
    tile_ho = fit[-1] if fit else legal[0]
    # Keep >=4 grid steps alive for megacore (v7x: 2 TCs) / pipeline warm-up.
    if B * n_co * (Ho // tile_ho) < 4:
        smaller = [t for t in legal
                   if t < tile_ho and t * Wo >= 256 and B * n_co * (Ho // t) >= 4]
        if smaller:
            tile_ho = smaller[-1]
    return tile_co, tile_ho, footprint(tile_co, tile_ho)


def downsample_forward(x_nchw, weight_oihw, bias, time_emb=None, classes=None,
                       *, compute_dtype=jnp.bfloat16, out_dtype=None,
                       vmem_budget_bytes=20 * 1024 * 1024):
    """Forward of DownSample: Conv2d(C, C, 3, stride=2, padding=1), NCHW in/out.

    time_emb / classes are ignored (kept for call-signature parity).
    """
    B, C, H, W = x_nchw.shape
    if H % 2 == 1 or W % 2 == 1:
        raise ValueError(
            "downsampling tensor height or width should be even", x_nchw.shape)
    Ho, Wo = H // 2, W // 2
    P = Ho * Wo
    K = 9 * C
    out_dtype = x_nchw.dtype if out_dtype is None else out_dtype

    # ---- single restructuring pass (replaces transpose + im2col + pad) --------
    # Phase tensor r_kh = padded rows {2*ho + kh}; column-even phase has Wo+1
    # columns (serves kw=0 and kw=2 via a +/-0/1 shift), column-odd has Wo.
    x_nhwc = jnp.transpose(x_nchw, (0, 2, 3, 1))
    x_pad = jnp.pad(x_nhwc, ((0, 0), (1, 1), (1, 1), (0, 0)))
    phases = []
    for kh in range(3):
        r = x_pad[:, kh:kh + 2 * Ho:2, :, :]                     # [B, Ho, W+2, C]
        ce = r[:, :, 0:2 * Wo + 2:2, :].astype(compute_dtype)    # [B, Ho, Wo+1, C]
        co = r[:, :, 1:2 * Wo + 1:2, :].astype(compute_dtype)    # [B, Ho, Wo,   C]
        phases.extend([ce, co])

    # weights: OIHW -> [(kh*3 + kw)*Cin + ci, Cout] (matches in-kernel tap order)
    w_flat = jnp.transpose(weight_oihw, (2, 3, 1, 0)).reshape(K, C).astype(compute_dtype)
    b2 = bias.reshape(1, C).astype(jnp.float32)

    in_bytes = jnp.dtype(compute_dtype).itemsize
    out_bytes = jnp.dtype(out_dtype).itemsize
    tile_co, tile_ho, est = _choose_tiles(B, C, Ho, Wo, in_bytes, out_bytes,
                                          vmem_budget_bytes)
    n_co = C // tile_co
    n_p = Ho // tile_ho
    tile_p = tile_ho * Wo
    # Scoped VMEM limit derived from the tile footprint; stays <= v7x's 64 MiB
    # for budget-conforming tiles, and unlocks >32 MiB on v5e/v6e when needed.
    vmem_limit = int(max(32 * 1024 * 1024,
                         min(2 * est + (8 << 20), 96 * 1024 * 1024)))

    phase_specs = []
    for _ in range(3):
        phase_specs.append(
            pl.BlockSpec((1, tile_ho, Wo + 1, C), lambda b, n, p: (b, p, 0, 0)))
        phase_specs.append(
            pl.BlockSpec((1, tile_ho, Wo, C), lambda b, n, p: (b, p, 0, 0)))

    out_flat = pl.pallas_call(
        _downsample_kernel,
        out_shape=jax.ShapeDtypeStruct((B, C, P), out_dtype),
        grid_spec=pltpu.PrefetchScalarGridSpec(
            num_scalar_prefetch=0,
            grid=(B, n_co, n_p),           # p innermost: weights stay resident
            in_specs=phase_specs + [
                pl.BlockSpec((K, tile_co), lambda b, n, p: (0, n)),
                pl.BlockSpec((1, tile_co), lambda b, n, p: (0, n)),
            ],
            out_specs=pl.BlockSpec((1, tile_co, tile_p), lambda b, n, p: (b, n, p)),
        ),
        compiler_params=pltpu.CompilerParams(
            dimension_semantics=("parallel", "parallel", "parallel"),
            vmem_limit_bytes=vmem_limit,
        ),
    )(*phases, w_flat, b2)

    # [B, C, Ho*Wo] is already NCHW-ordered; the reshape is free.
    return out_flat.reshape(B, C, Ho, Wo)


if __name__ == "__main__":
    B, C, H, W = 2, 4, 16, 16

    key = jax.random.PRNGKey(0)
    kx, kw, kb = jax.random.split(key, 3)
    x = jax.random.normal(kx, (B, C, H, W), dtype=jnp.float32)
    # deterministic synthetic parameters (nn.Conv2d(C, C, 3) shapes)
    weight = jax.random.normal(kw, (C, C, 3, 3), dtype=jnp.float32) * 0.1
    bias = jax.random.normal(kb, (C,), dtype=jnp.float32) * 0.1

    out = jax.block_until_ready(downsample_forward(x, weight, bias))
    assert out.shape == (B, C, H // 2, W // 2), out.shape

    # self-check: reference conv computed with the same bf16-rounded operands
    # (kernel uses bf16 MXU inputs with f32 accumulation).
    xq = x.astype(jnp.bfloat16).astype(jnp.float32)
    wq = weight.astype(jnp.bfloat16).astype(jnp.float32)
    ref = jax.lax.conv_general_dilated(
        xq, wq, window_strides=(2, 2), padding=((1, 1), (1, 1)),
        dimension_numbers=("NCHW", "OIHW", "NCHW"),
    ) + bias.reshape(1, C, 1, 1)
    max_err = float(jnp.max(jnp.abs(out - ref)))
    assert max_err < 1e-3, max_err

    print("KERNEL_OK")
</pallas_src>

<mosaic_0001>
module attributes {stable_mosaic.version = 11 : i64} {
  func.func @_downsample_kernel(%arg0: i32, %arg1: i32, %arg2: i32, %arg3: memref<1x8x9x4xbf16, #tpu.memory_space<vmem>>, %arg4: memref<1x8x8x4xbf16, #tpu.memory_space<vmem>>, %arg5: memref<1x8x9x4xbf16, #tpu.memory_space<vmem>>, %arg6: memref<1x8x8x4xbf16, #tpu.memory_space<vmem>>, %arg7: memref<1x8x9x4xbf16, #tpu.memory_space<vmem>>, %arg8: memref<1x8x8x4xbf16, #tpu.memory_space<vmem>>, %arg9: memref<36x4xbf16, #tpu.memory_space<vmem>>, %arg10: memref<1x4xf32, #tpu.memory_space<vmem>>, %arg11: memref<1x4x64xf32, #tpu.memory_space<vmem>>) attributes {dimension_semantics = [#tpu.dimension_semantics<parallel>, #tpu.dimension_semantics<parallel>, #tpu.dimension_semantics<parallel>], iteration_bounds = array<i64: 2, 1, 1>, scalar_prefetch = 0 : i64, scratch_operands = 0 : i64, tpu.core_type = #tpu.core_type<tc>, window_params = [{transform_indices = @transform_0, window_bounds = array<i64: 1, 8, 9, 4>}, {transform_indices = @transform_1, window_bounds = array<i64: 1, 8, 8, 4>}, {transform_indices = @transform_2, window_bounds = array<i64: 1, 8, 9, 4>}, {transform_indices = @transform_3, window_bounds = array<i64: 1, 8, 8, 4>}, {transform_indices = @transform_4, window_bounds = array<i64: 1, 8, 9, 4>}, {transform_indices = @transform_5, window_bounds = array<i64: 1, 8, 8, 4>}, {transform_indices = @transform_6, window_bounds = array<i64: 36, 4>}, {transform_indices = @transform_7, window_bounds = array<i64: 1, 4>}, {transform_indices = @transform_8, window_bounds = array<i64: 1, 4, 64>}]} {
    %c0 = arith.constant 0 : index
    %c0_0 = arith.constant 0 : index
    %c0_1 = arith.constant 0 : index
    %c0_2 = arith.constant 0 : index
    %0 = vector.load %arg3[%c0, %c0_0, %c0_1, %c0_2] : memref<1x8x9x4xbf16, #tpu.memory_space<vmem>>, vector<1x8x9x4xbf16>
    %1 = vector.shape_cast %0 : vector<1x8x9x4xbf16> to vector<8x9x4xbf16>
    %c0_3 = arith.constant 0 : index
    %c0_4 = arith.constant 0 : index
    %c0_5 = arith.constant 0 : index
    %c0_6 = arith.constant 0 : index
    %2 = vector.load %arg4[%c0_3, %c0_4, %c0_5, %c0_6] : memref<1x8x8x4xbf16, #tpu.memory_space<vmem>>, vector<1x8x8x4xbf16>
    %3 = vector.shape_cast %2 : vector<1x8x8x4xbf16> to vector<8x8x4xbf16>
    %4 = vector.extract_strided_slice %1 {offsets = [0, 0, 0], sizes = [8, 8, 4], strides = [1, 1, 1]} : vector<8x9x4xbf16> to vector<8x8x4xbf16>
    %5 = vector.extract_strided_slice %1 {offsets = [0, 1, 0], sizes = [8, 8, 4], strides = [1, 1, 1]} : vector<8x9x4xbf16> to vector<8x8x4xbf16>
    %c0_7 = arith.constant 0 : index
    %c0_8 = arith.constant 0 : index
    %c0_9 = arith.constant 0 : index
    %c0_10 = arith.constant 0 : index
    %6 = vector.load %arg5[%c0_7, %c0_8, %c0_9, %c0_10] : memref<1x8x9x4xbf16, #tpu.memory_space<vmem>>, vector<1x8x9x4xbf16>
    %7 = vector.shape_cast %6 : vector<1x8x9x4xbf16> to vector<8x9x4xbf16>
    %c0_11 = arith.constant 0 : index
    %c0_12 = arith.constant 0 : index
    %c0_13 = arith.constant 0 : index
    %c0_14 = arith.constant 0 : index
    %8 = vector.load %arg6[%c0_11, %c0_12, %c0_13, %c0_14] : memref<1x8x8x4xbf16, #tpu.memory_space<vmem>>, vector<1x8x8x4xbf16>
    %9 = vector.shape_cast %8 : vector<1x8x8x4xbf16> to vector<8x8x4xbf16>
    %10 = vector.extract_strided_slice %7 {offsets = [0, 0, 0], sizes = [8, 8, 4], strides = [1, 1, 1]} : vector<8x9x4xbf16> to vector<8x8x4xbf16>
    %11 = vector.extract_strided_slice %7 {offsets = [0, 1, 0], sizes = [8, 8, 4], strides = [1, 1, 1]} : vector<8x9x4xbf16> to vector<8x8x4xbf16>
    %c0_15 = arith.constant 0 : index
    %c0_16 = arith.constant 0 : index
    %c0_17 = arith.constant 0 : index
    %c0_18 = arith.constant 0 : index
    %12 = vector.load %arg7[%c0_15, %c0_16, %c0_17, %c0_18] : memref<1x8x9x4xbf16, #tpu.memory_space<vmem>>, vector<1x8x9x4xbf16>
    %13 = vector.shape_cast %12 : vector<1x8x9x4xbf16> to vector<8x9x4xbf16>
    %c0_19 = arith.constant 0 : index
    %c0_20 = arith.constant 0 : index
    %c0_21 = arith.constant 0 : index
    %c0_22 = arith.constant 0 : index
    %14 = vector.load %arg8[%c0_19, %c0_20, %c0_21, %c0_22] : memref<1x8x8x4xbf16, #tpu.memory_space<vmem>>, vector<1x8x8x4xbf16>
    %15 = vector.shape_cast %14 : vector<1x8x8x4xbf16> to vector<8x8x4xbf16>
    %16 = vector.extract_strided_slice %13 {offsets = [0, 0, 0], sizes = [8, 8, 4], strides = [1, 1, 1]} : vector<8x9x4xbf16> to vector<8x8x4xbf16>
    %17 = vector.extract_strided_slice %13 {offsets = [0, 1, 0], sizes = [8, 8, 4], strides = [1, 1, 1]} : vector<8x9x4xbf16> to vector<8x8x4xbf16>
    %18 = tpu.concatenate %4, %3, %5, %10, %9, %11, %16, %15, %17 in 2 : vector<8x8x4xbf16>, vector<8x8x4xbf16>, vector<8x8x4xbf16>, vector<8x8x4xbf16>, vector<8x8x4xbf16>, vector<8x8x4xbf16>, vector<8x8x4xbf16>, vector<8x8x4xbf16>, vector<8x8x4xbf16> -> vector<8x8x36xbf16>
    %19 = vector.shape_cast %18 : vector<8x8x36xbf16> to vector<64x36xbf16>
    %c0_23 = arith.constant 0 : index
    %c0_24 = arith.constant 0 : index
    %20 = vector.load %arg9[%c0_23, %c0_24] : memref<36x4xbf16, #tpu.memory_space<vmem>>, vector<36x4xbf16>
    %cst = arith.constant dense<0.000000e+00> : vector<64x4xf32>
    %21 = tpu.matmul %19, %20, %cst {dimension_numbers = #tpu.dot_dimension_numbers<[1], [0], [0], [1], [0, 0, 1, 1], [], []>} : vector<64x36xbf16>, vector<36x4xbf16>, vector<64x4xf32> -> vector<64x4xf32>
    %c0_25 = arith.constant 0 : index
    %c0_26 = arith.constant 0 : index
    %22 = vector.load %arg10[%c0_25, %c0_26] : memref<1x4xf32, #tpu.memory_space<vmem>>, vector<1x4xf32>
    %23 = vector.broadcast %22 : vector<1x4xf32> to vector<64x4xf32>
    %24 = arith.addf %21, %23 : vector<64x4xf32>
    %25 = tpu.transpose %24, [1, 0] : vector<64x4xf32> -> vector<4x64xf32>
    %c0_27 = arith.constant 0 : index
    %c0_28 = arith.constant 0 : index
    %c0_29 = arith.constant 0 : index
    %26 = vector.load %arg11[%c0_27, %c0_28, %c0_29] : memref<1x4x64xf32, #tpu.memory_space<vmem>>, vector<1x4x64xf32>
    %27 = vector.shape_cast %26 : vector<1x4x64xf32> to vector<4x64xf32>
    %28 = vector.shape_cast %25 : vector<4x64xf32> to vector<1x4x64xf32>
    tpu.vector_store %arg11[%c0_27, %c0_28, %c0_29], %28 {strides = array<i32>} : memref<1x4x64xf32, #tpu.memory_space<vmem>>, vector<1x4x64xf32>,
    return
  }
  func.func @transform_0(%arg0: i32, %arg1: i32, %arg2: i32) -> (i32, i32, i32, i32) {
    %c0_i32 = arith.constant 0 : i32
    %c0_i32_0 = arith.constant 0 : i32
    %c0_i32_1 = arith.constant 0 : i32
    return %arg0, %arg2, %c0_i32, %c0_i32_0 : i32, i32, i32, i32
  }
  func.func @transform_1(%arg0: i32, %arg1: i32, %arg2: i32) -> (i32, i32, i32, i32) {
    %c0_i32 = arith.constant 0 : i32
    %c0_i32_0 = arith.constant 0 : i32
    %c0_i32_1 = arith.constant 0 : i32
    return %arg0, %arg2, %c0_i32, %c0_i32_0 : i32, i32, i32, i32
  }
  func.func @transform_2(%arg0: i32, %arg1: i32, %arg2: i32) -> (i32, i32, i32, i32) {
    %c0_i32 = arith.constant 0 : i32
    %c0_i32_0 = arith.constant 0 : i32
    %c0_i32_1 = arith.constant 0 : i32
    return %arg0, %arg2, %c0_i32, %c0_i32_0 : i32, i32, i32, i32
  }
  func.func @transform_3(%arg0: i32, %arg1: i32, %arg2: i32) -> (i32, i32, i32, i32) {
    %c0_i32 = arith.constant 0 : i32
    %c0_i32_0 = arith.constant 0 : i32
    %c0_i32_1 = arith.constant 0 : i32
    return %arg0, %arg2, %c0_i32, %c0_i32_0 : i32, i32, i32, i32
  }
  func.func @transform_4(%arg0: i32, %arg1: i32, %arg2: i32) -> (i32, i32, i32, i32) {
    %c0_i32 = arith.constant 0 : i32
    %c0_i32_0 = arith.constant 0 : i32
    %c0_i32_1 = arith.constant 0 : i32
    return %arg0, %arg2, %c0_i32, %c0_i32_0 : i32, i32, i32, i32
  }
  func.func @transform_5(%arg0: i32, %arg1: i32, %arg2: i32) -> (i32, i32, i32, i32) {
    %c0_i32 = arith.constant 0 : i32
    %c0_i32_0 = arith.constant 0 : i32
    %c0_i32_1 = arith.constant 0 : i32
    return %arg0, %arg2, %c0_i32, %c0_i32_0 : i32, i32, i32, i32
  }
  func.func @transform_6(%arg0: i32, %arg1: i32, %arg2: i32) -> (i32, i32) {
    %c0_i32 = arith.constant 0 : i32
    %c0_i32_0 = arith.constant 0 : i32
    return %c0_i32, %arg1 : i32, i32
  }
  func.func @transform_7(%arg0: i32, %arg1: i32, %arg2: i32) -> (i32, i32) {
    %c0_i32 = arith.constant 0 : i32
    %c0_i32_0 = arith.constant 0 : i32
    return %c0_i32, %arg1 : i32, i32
  }
  func.func @transform_8(%arg0: i32, %arg1: i32, %arg2: i32) -> (i32, i32, i32) {
    %c0_i32 = arith.constant 0 : i32
    return %arg0, %arg1, %arg2 : i32, i32, i32
  }
}

</mosaic_0001>

<llo_original>
// kernel: tpu_custom_call.1
$region0: #{tpu_custom_call.1}
  #allocation0 [shape = 'u32[]', space=smem, size = 0x4, offset = 0x4, fixed_abs, tag = 'smem constant byte address 0x4 - core index']
  #allocation1 [shape = 'u32[144,128]{1,0:T(1,128)}', space=vmem, size = 0x12000, scoped, tag = 'internal scratch']
  %s0 = inlined_call_operand.vmem [shape: bf16[2,8,9,4], index: 0, kind: input, shape index: {}]
  %s1 = inlined_call_operand.vmem [shape: bf16[2,8,8,4], index: 1, kind: input, shape index: {}]
  %s2 = inlined_call_operand.vmem [shape: bf16[2,8,9,4], index: 2, kind: input, shape index: {}]
  %s3 = inlined_call_operand.vmem [shape: bf16[2,8,8,4], index: 3, kind: input, shape index: {}]
  %s4 = inlined_call_operand.vmem [shape: bf16[2,8,9,4], index: 4, kind: input, shape index: {}]
  %s5 = inlined_call_operand.vmem [shape: bf16[2,8,8,4], index: 5, kind: input, shape index: {}]
  %s6 = inlined_call_operand.vmem [shape: bf16[36,4], index: 6, kind: input, shape index: {}]
  %s7 = inlined_call_operand.vmem [shape: f32[1,4], index: 7, kind: input, shape index: {}]
  %s8 = inlined_call_operand.hbm [shape: f32[2,4,64], index: 8, kind: output, shape index: {}]
  %s9 = sld [smem:[#allocation0]]
  $region65: #{tpu_custom_call.1} parent=0
    _
  %s11 = ssub.s32 1, %s9
  %s12 = scalar_select 0, %s11, %s9
  $region1: #{tpu_custom_call.1} parent=0
    #allocation2 [shape = 'u8[4096]{0}', space=vmem, size = 0x1000, scoped, tag = 'output window, operand 0']
    #allocation3 [shape = 's32[2]{0}', space=sflag, size = 0x8, scoped, tag = 'scoped memory for tpu_custom_call.1']
    %13 = vsyncpa [#allocation3], 0
    %s14 = scalar_lea.sflag [#allocation3], 1
    %15 = vsyncpa %s14, 0
    loop: start=0, step=1, limit=4
    $region2: #{tpu_custom_call.1} parent=1 // loop_pre_header
      _
    $region3: #{tpu_custom_call.1} parent=1 // loop_header
      %s17 = sphi 0, %s21
      %p18 = scmp.ge.s32.totalorder %s17, 4
      %s24 = sphi 0, %s43
      %s25 = sphi 0, %s39
      %s26 = sphi 0, %s35
      %s27 = sphi 0, %s24
      %s28 = sphi 0, %s25
      %s29 = sphi 0, %s26
      %s30 = sphi 0, %s27
      %s31 = sphi 0, %s28
      %s32 = sphi 0, %s29
      %s48 = sphi 0, %s50
      %s51 = sphi 0, %s48
      %s52 = sphi 0, %s51
      %s68 = sphi 0, %s52
      %s76 = sphi 0, %s78
      %s79 = sphi 0, %s76
      %s80 = sphi 0, %s79
      %s96 = sphi 0, %s80
      %s104 = sphi 0, %s106
      %s107 = sphi 0, %s104
      %s108 = sphi 0, %s107
      %s124 = sphi 0, %s108
      %s132 = sphi 0, %s134
      %s135 = sphi 0, %s132
      %s136 = sphi 0, %s135
      %s152 = sphi 0, %s136
      %s160 = sphi 0, %s162
      %s163 = sphi 0, %s160
      %s164 = sphi 0, %s163
      %s180 = sphi 0, %s164
      %s188 = sphi 0, %s190
      %s191 = sphi 0, %s188
      %s192 = sphi 0, %s191
      %s208 = sphi 0, %s192
      %s214 = sphi 0, %s216
      %s217 = sphi 0, %s214
      %s218 = sphi 0, %s217
      %s234 = sphi 0, %s218
      %s240 = sphi 0, %s242
      %s243 = sphi 0, %s240
      %s244 = sphi 0, %s243
      %s260 = sphi 0, %s244
      %s270 = sphi 0, %s272
      %s273 = sphi 0, %s270
      %s274 = sphi 0, %s273
      %s290 = sphi 0, %s274
    $region4: #{tpu_custom_call.1} parent=1 // loop_header_branch
      %20 = sbr.rel (%p18) target = $region8
    $region5: #{tpu_custom_call.1} parent=1 // loop_body
      %s22 = ssub.s32 %s17, 1
      %s23 = ssub.s32 %s17, 2
      %s33 = sadd.s32 1, %s26
      %p34 = scmp.ge.s32.totalorder %s33, 1
      %s35 = scalar_select %p34, 0, %s33
      %s36 = sadd.s32 1, %s25
      %s37 = scalar_select %p34, %s36, %s25
      %p38 = scmp.ge.s32.totalorder %s37, 1
      %s39 = scalar_select %p38, 0, %s37
      %s40 = sadd.s32 1, %s24
      %s41 = scalar_select %p38, %s40, %s24
      %p42 = scmp.ge.s32.totalorder %s41, 2
      %s43 = scalar_select %p42, 0, %s41
      %s44 = ssub.s32 %s24, %s43
      %s45 = ssub.s32 %s26, %s35
      %s46 = sor.u32 %s44, %s45
      %p47 = scmp.eq.s32.totalorder %s46, 0
      %s49 = sadd.s32 %s48, 1
      %s50 = scalar_select %p47, %s48, %s49
      %p53 = pneg %p47
      %p54 = scmp.eq.s32.totalorder %s17, 1
      %p55 = por %p53, %p54
      %p56 = scmp.ne.s32.totalorder %s48, %s51
      %p57 = scmp.eq.s32.totalorder %s17, 0
      %p58 = por %p56, %p57
      %p59 = scmp.ne.s32.totalorder %s48, %s51
      %p60 = scmp.eq.s32.totalorder %s22, 1
      %p61 = por %p59, %p60
      %p62 = scmp.ne.s32.totalorder %s51, %s52
      %p63 = scmp.eq.s32.totalorder %s22, 0
      %p64 = por %p62, %p63
      %p65 = scmp.ne.s32.totalorder %s51, %s52
      %p66 = scmp.eq.s32.totalorder %s23, 1
      %p67 = por %p65, %p66
      %p69 = scmp.ne.s32.totalorder %s52, %s68
      %p70 = scmp.eq.s32.totalorder %s23, 0
      %p71 = por %p69, %p70
      %s72 = ssub.s32 %s24, %s43
      %s73 = ssub.s32 %s26, %s35
      %s74 = sor.u32 %s72, %s73
      %p75 = scmp.eq.s32.totalorder %s74, 0
      %s77 = sadd.s32 %s76, 1
      %s78 = scalar_select %p75, %s76, %s77
      %p81 = pneg %p75
      %p82 = scmp.eq.s32.totalorder %s17, 1
      %p83 = por %p81, %p82
      %p84 = scmp.ne.s32.totalorder %s76, %s79
      %p85 = scmp.eq.s32.totalorder %s17, 0
      %p86 = por %p84, %p85
      %p87 = scmp.ne.s32.totalorder %s76, %s79
      %p88 = scmp.eq.s32.totalorder %s22, 1
      %p89 = por %p87, %p88
      %p90 = scmp.ne.s32.totalorder %s79, %s80
      %p91 = scmp.eq.s32.totalorder %s22, 0
      %p92 = por %p90, %p91
      %p93 = scmp.ne.s32.totalorder %s79, %s80
      %p94 = scmp.eq.s32.totalorder %s23, 1
      %p95 = por %p93, %p94
      %p97 = scmp.ne.s32.totalorder %s80, %s96
      %p98 = scmp.eq.s32.totalorder %s23, 0
      %p99 = por %p97, %p98
      %s100 = ssub.s32 %s24, %s43
      %s101 = ssub.s32 %s26, %s35
      %s102 = sor.u32 %s100, %s101
      %p103 = scmp.eq.s32.totalorder %s102, 0
      %s105 = sadd.s32 %s104, 1
      %s106 = scalar_select %p103, %s104, %s105
      %p109 = pneg %p103
      %p110 = scmp.eq.s32.totalorder %s17, 1
      %p111 = por %p109, %p110
      %p112 = scmp.ne.s32.totalorder %s104, %s107
      %p113 = scmp.eq.s32.totalorder %s17, 0
      %p114 = por %p112, %p113
      %p115 = scmp.ne.s32.totalorder %s104, %s107
      %p116 = scmp.eq.s32.totalorder %s22, 1
      %p117 = por %p115, %p116
      %p118 = scmp.ne.s32.totalorder %s107, %s108
      %p119 = scmp.eq.s32.totalorder %s22, 0
      %p120 = por %p118, %p119
      %p121 = scmp.ne.s32.totalorder %s107, %s108
      %p122 = scmp.eq.s32.totalorder %s23, 1
      %p123 = por %p121, %p122
      %p125 = scmp.ne.s32.totalorder %s108, %s124
      %p126 = scmp.eq.s32.totalorder %s23, 0
      %p127 = por %p125, %p126
      %s128 = ssub.s32 %s24, %s43
      %s129 = ssub.s32 %s26, %s35
      %s130 = sor.u32 %s128, %s129
      %p131 = scmp.eq.s32.totalorder %s130, 0
      %s133 = sadd.s32 %s132, 1
      %s134 = scalar_select %p131, %s132, %s133
      %p137 = pneg %p131
      %p138 = scmp.eq.s32.totalorder %s17, 1
      %p139 = por %p137, %p138
      %p140 = scmp.ne.s32.totalorder %s132, %s135
      %p141 = scmp.eq.s32.totalorder %s17, 0
      %p142 = por %p140, %p141
      %p143 = scmp.ne.s32.totalorder %s132, %s135
      %p144 = scmp.eq.s32.totalorder %s22, 1
      %p145 = por %p143, %p144
      %p146 = scmp.ne.s32.totalorder %s135, %s136
      %p147 = scmp.eq.s32.totalorder %s22, 0
      %p148 = por %p146, %p147
      %p149 = scmp.ne.s32.totalorder %s135, %s136
      %p150 = scmp.eq.s32.totalorder %s23, 1
      %p151 = por %p149, %p150
      %p153 = scmp.ne.s32.totalorder %s136, %s152
      %p154 = scmp.eq.s32.totalorder %s23, 0
      %p155 = por %p153, %p154
      %s156 = ssub.s32 %s24, %s43
      %s157 = ssub.s32 %s26, %s35
      %s158 = sor.u32 %s156, %s157
      %p159 = scmp.eq.s32.totalorder %s158, 0
      %s161 = sadd.s32 %s160, 1
      %s162 = scalar_select %p159, %s160, %s161
      %p165 = pneg %p159
      %p166 = scmp.eq.s32.totalorder %s17, 1
      %p167 = por %p165, %p166
      %p168 = scmp.ne.s32.totalorder %s160, %s163
      %p169 = scmp.eq.s32.totalorder %s17, 0
      %p170 = por %p168, %p169
      %p171 = scmp.ne.s32.totalorder %s160, %s163
      %p172 = scmp.eq.s32.totalorder %s22, 1
      %p173 = por %p171, %p172
      %p174 = scmp.ne.s32.totalorder %s163, %s164
      %p175 = scmp.eq.s32.totalorder %s22, 0
      %p176 = por %p174, %p175
      %p177 = scmp.ne.s32.totalorder %s163, %s164
      %p178 = scmp.eq.s32.totalorder %s23, 1
      %p179 = por %p177, %p178
      %p181 = scmp.ne.s32.totalorder %s164, %s180
      %p182 = scmp.eq.s32.totalorder %s23, 0
      %p183 = por %p181, %p182
      %s184 = ssub.s32 %s24, %s43
      %s185 = ssub.s32 %s26, %s35
      %s186 = sor.u32 %s184, %s185
      %p187 = scmp.eq.s32.totalorder %s186, 0
      %s189 = sadd.s32 %s188, 1
      %s190 = scalar_select %p187, %s188, %s189
      %p193 = pneg %p187
      %p194 = scmp.eq.s32.totalorder %s17, 1
      %p195 = por %p193, %p194
      %p196 = scmp.ne.s32.totalorder %s188, %s191
      %p197 = scmp.eq.s32.totalorder %s17, 0
      %p198 = por %p196, %p197
      %p199 = scmp.ne.s32.totalorder %s188, %s191
      %p200 = scmp.eq.s32.totalorder %s22, 1
      %p201 = por %p199, %p200
      %p202 = scmp.ne.s32.totalorder %s191, %s192
      %p203 = scmp.eq.s32.totalorder %s22, 0
      %p204 = por %p202, %p203
      %p205 = scmp.ne.s32.totalorder %s191, %s192
      %p206 = scmp.eq.s32.totalorder %s23, 1
      %p207 = por %p205, %p206
      %p209 = scmp.ne.s32.totalorder %s192, %s208
      %p210 = scmp.eq.s32.totalorder %s23, 0
      %p211 = por %p209, %p210
      %s212 = ssub.s32 %s25, %s39
      %p213 = scmp.eq.s32.totalorder %s212, 0
      %s215 = sadd.s32 %s214, 1
      %s216 = scalar_select %p213, %s214, %s215
      %p219 = pneg %p213
      %p220 = scmp.eq.s32.totalorder %s17, 1
      %p221 = por %p219, %p220
      %p222 = scmp.ne.s32.totalorder %s214, %s217
      %p223 = scmp.eq.s32.totalorder %s17, 0
      %p224 = por %p222, %p223
      %p225 = scmp.ne.s32.totalorder %s214, %s217
      %p226 = scmp.eq.s32.totalorder %s22, 1
      %p227 = por %p225, %p226
      %p228 = scmp.ne.s32.totalorder %s217, %s218
      %p229 = scmp.eq.s32.totalorder %s22, 0
      %p230 = por %p228, %p229
      %p231 = scmp.ne.s32.totalorder %s217, %s218
      %p232 = scmp.eq.s32.totalorder %s23, 1
      %p233 = por %p231, %p232
      %p235 = scmp.ne.s32.totalorder %s218, %s234
      %p236 = scmp.eq.s32.totalorder %s23, 0
      %p237 = por %p235, %p236
      %s238 = ssub.s32 %s25, %s39
      %p239 = scmp.eq.s32.totalorder %s238, 0
      %s241 = sadd.s32 %s240, 1
      %s242 = scalar_select %p239, %s240, %s241
      %p245 = pneg %p239
      %p246 = scmp.eq.s32.totalorder %s17, 1
      %p247 = por %p245, %p246
      %p248 = scmp.ne.s32.totalorder %s240, %s243
      %p249 = scmp.eq.s32.totalorder %s17, 0
      %p250 = por %p248, %p249
      %p251 = scmp.ne.s32.totalorder %s240, %s243
      %p252 = scmp.eq.s32.totalorder %s22, 1
      %p253 = por %p251, %p252
      %p254 = scmp.ne.s32.totalorder %s243, %s244
      %p255 = scmp.eq.s32.totalorder %s22, 0
      %p256 = por %p254, %p255
      %p257 = scmp.ne.s32.totalorder %s243, %s244
      %p258 = scmp.eq.s32.totalorder %s23, 1
      %p259 = por %p257, %p258
      %p261 = scmp.ne.s32.totalorder %s244, %s260
      %p262 = scmp.eq.s32.totalorder %s23, 0
      %p263 = por %p261, %p262
      %s264 = ssub.s32 %s24, %s43
      %s265 = ssub.s32 %s25, %s39
      %s266 = sor.u32 %s264, %s265
      %s267 = ssub.s32 %s26, %s35
      %s268 = sor.u32 %s266, %s267
      %p269 = scmp.eq.s32.totalorder %s268, 0
      %s271 = sadd.s32 %s270, 1
      %s272 = scalar_select %p269, %s270, %s271
      %p275 = pneg %p269
      %p276 = scmp.eq.s32.totalorder %s17, 1
      %p277 = por %p275, %p276
      %p278 = scmp.ne.s32.totalorder %s270, %s273
      %p279 = scmp.eq.s32.totalorder %s17, 0
      %p280 = por %p278, %p279
      %p281 = scmp.ne.s32.totalorder %s270, %s273
      %p282 = scmp.eq.s32.totalorder %s22, 1
      %p283 = por %p281, %p282
      %p284 = scmp.ne.s32.totalorder %s273, %s274
      %p285 = scmp.eq.s32.totalorder %s22, 0
      %p286 = por %p284, %p285
      %p287 = scmp.ne.s32.totalorder %s273, %s274
      %p288 = scmp.eq.s32.totalorder %s23, 1
      %p289 = por %p287, %p288
      %p291 = scmp.ne.s32.totalorder %s274, %s290
      %p292 = scmp.eq.s32.totalorder %s23, 0
      %p293 = por %p291, %p292
      %p294 = scmp.le.s32.totalorder 1, %s17
      %p295 = scmp.lt.s32.totalorder %s17, 3
      %p296 = pnand %p294, %p295
      %p297 = pneg %p296
      // Predicated region
      $region9: #{tpu_custom_call.1} parent=5 // pred_check
        _
      $region10: #{tpu_custom_call.1} parent=5 // pred_check_branch
        %299 = sbr.rel (%p296) target = $region12
      $region11: #{tpu_custom_call.1} parent=5 // pred_region
        %s300 = ssub.s32 %s17, 1
        // Predicated region
        $region13: #{tpu_custom_call.1} parent=11 // pred_check
          %p301 = pneg %p230
        $region14: #{tpu_custom_call.1} parent=11 // pred_check_branch
          %303 = sbr.rel (%p301) target = $region16
        $region15: #{tpu_custom_call.1} parent=11 // pred_region
          %p304 = scmp.lt.s32.totalorder %s28, 0
          %s305 = scalar_select %p304, %s28, 0
          %s306 = smul.addr %s305, 4
          %s307 = scalar_lea.vmem %s6, %s306
        $region16: #{tpu_custom_call.1} parent=11 // pred_fallthru
          _
        // Predicated region
        $region17: #{tpu_custom_call.1} parent=11 // pred_check
          %p308 = pneg %p256
        $region18: #{tpu_custom_call.1} parent=11 // pred_check_branch
          %310 = sbr.rel (%p308) target = $region20
        $region19: #{tpu_custom_call.1} parent=11 // pred_region
          %p311 = scmp.lt.s32.totalorder %s28, 0
          %s312 = scalar_select %p311, %s28, 0
          %s313 = scalar_lea.vmem %s7, %s312
        $region20: #{tpu_custom_call.1} parent=11 // pred_fallthru
          _
      $region12: #{tpu_custom_call.1} parent=5 // pred_fallthru
        _
      %p314 = scmp.lt.s32.totalorder %s17, 2
      // Predicated region
      $region21: #{tpu_custom_call.1} parent=5 // pred_check
        %p315 = pneg %p314
      $region22: #{tpu_custom_call.1} parent=5 // pred_check_branch
        %317 = sbr.rel (%p315) target = $region24
      $region23: #{tpu_custom_call.1} parent=5 // pred_region
        // Predicated region
        $region25: #{tpu_custom_call.1} parent=23 // pred_check
          %p318 = pneg %p58
        $region26: #{tpu_custom_call.1} parent=23 // pred_check_branch
          %320 = sbr.rel (%p318) target = $region28
        $region27: #{tpu_custom_call.1} parent=23 // pred_region
          %s321 = smul.u32 8, %s26
          %p322 = scmp.lt.s32.totalorder %s24, 1
          %s323 = scalar_select %p322, %s24, 1
          %p324 = scmp.lt.s32.totalorder %s321, 7
          %s325 = scalar_select %p324, %s321, 7
          %s326 = smul.addr %s325, 2
          %s327 = smul.addr %s323, 16
          %s328 = sadd.s32 %s326, %s327
          %s329 = smul.addr %s328, 4
          %s330 = scalar_lea.vmem %s0, %s329
          %s331 = smul.u32 8, %s26
        $region28: #{tpu_custom_call.1} parent=23 // pred_fallthru
          _
        // Predicated region
        $region29: #{tpu_custom_call.1} parent=23 // pred_check
          %p332 = pneg %p86
        $region30: #{tpu_custom_call.1} parent=23 // pred_check_branch
          %334 = sbr.rel (%p332) target = $region32
        $region31: #{tpu_custom_call.1} parent=23 // pred_region
          %s335 = smul.u32 8, %s26
          %p336 = scmp.lt.s32.totalorder %s24, 1
          %s337 = scalar_select %p336, %s24, 1
          %p338 = scmp.lt.s32.totalorder %s335, 7
          %s339 = scalar_select %p338, %s335, 7
          %s340 = smul.addr %s337, 8
          %s341 = sadd.s32 %s339, %s340
          %s342 = smul.addr %s341, 4
          %s343 = scalar_lea.vmem %s1, %s342
          %s344 = smul.u32 8, %s26
        $region32: #{tpu_custom_call.1} parent=23 // pred_fallthru
          _
        // Predicated region
        $region33: #{tpu_custom_call.1} parent=23 // pred_check
          %p345 = pneg %p114
        $region34: #{tpu_custom_call.1} parent=23 // pred_check_branch
          %347 = sbr.rel (%p345) target = $region36
        $region35: #{tpu_custom_call.1} parent=23 // pred_region
          %s348 = smul.u32 8, %s26
          %p349 = scmp.lt.s32.totalorder %s24, 1
          %s350 = scalar_select %p349, %s24, 1
          %p351 = scmp.lt.s32.totalorder %s348, 7
          %s352 = scalar_select %p351, %s348, 7
          %s353 = smul.addr %s352, 2
          %s354 = smul.addr %s350, 16
          %s355 = sadd.s32 %s353, %s354
          %s356 = smul.addr %s355, 4
          %s357 = scalar_lea.vmem %s2, %s356
          %s358 = smul.u32 8, %s26
        $region36: #{tpu_custom_call.1} parent=23 // pred_fallthru
          _
        // Predicated region
        $region37: #{tpu_custom_call.1} parent=23 // pred_check
          %p359 = pneg %p142
        $region38: #{tpu_custom_call.1} parent=23 // pred_check_branch
          %361 = sbr.rel (%p359) target = $region40
        $region39: #{tpu_custom_call.1} parent=23 // pred_region
          %s362 = smul.u32 8, %s26
          %p363 = scmp.lt.s32.totalorder %s24, 1
          %s364 = scalar_select %p363, %s24, 1
          %p365 = scmp.lt.s32.totalorder %s362, 7
          %s366 = scalar_select %p365, %s362, 7
          %s367 = smul.addr %s364, 8
          %s368 = sadd.s32 %s366, %s367
          %s369 = smul.addr %s368, 4
          %s370 = scalar_lea.vmem %s3, %s369
          %s371 = smul.u32 8, %s26
        $region40: #{tpu_custom_call.1} parent=23 // pred_fallthru
          _
        // Predicated region
        $region41: #{tpu_custom_call.1} parent=23 // pred_check
          %p372 = pneg %p170
        $region42: #{tpu_custom_call.1} parent=23 // pred_check_branch
          %374 = sbr.rel (%p372) target = $region44
        $region43: #{tpu_custom_call.1} parent=23 // pred_region
          %s375 = smul.u32 8, %s26
          %p376 = scmp.lt.s32.totalorder %s24, 1
          %s377 = scalar_select %p376, %s24, 1
          %p378 = scmp.lt.s32.totalorder %s375, 7
          %s379 = scalar_select %p378, %s375, 7
          %s380 = smul.addr %s379, 2
          %s381 = smul.addr %s377, 16
          %s382 = sadd.s32 %s380, %s381
          %s383 = smul.addr %s382, 4
          %s384 = scalar_lea.vmem %s4, %s383
          %s385 = smul.u32 8, %s26
        $region44: #{tpu_custom_call.1} parent=23 // pred_fallthru
          _
        // Predicated region
        $region45: #{tpu_custom_call.1} parent=23 // pred_check
          %p386 = pneg %p198
        $region46: #{tpu_custom_call.1} parent=23 // pred_check_branch
          %388 = sbr.rel (%p386) target = $region48
        $region47: #{tpu_custom_call.1} parent=23 // pred_region
          %s389 = smul.u32 8, %s26
          %p390 = scmp.lt.s32.totalorder %s24, 1
          %s391 = scalar_select %p390, %s24, 1
          %p392 = scmp.lt.s32.totalorder %s389, 7
          %s393 = scalar_select %p392, %s389, 7
          %s394 = smul.addr %s391, 8
          %s395 = sadd.s32 %s393, %s394
          %s396 = smul.addr %s395, 4
          %s397 = scalar_lea.vmem %s5, %s396
          %s398 = smul.u32 8, %s26
        $region48: #{tpu_custom_call.1} parent=23 // pred_fallthru
          _
      $region24: #{tpu_custom_call.1} parent=5 // pred_fallthru
        _
      %p399 = scmp.le.s32.totalorder 1, %s17
      %p400 = scmp.lt.s32.totalorder %s17, 3
      %p401 = pnand %p399, %p400
      %p402 = pneg %p401
      // Predicated region
      $region49: #{tpu_custom_call.1} parent=5 // pred_check
        _
      $region50: #{tpu_custom_call.1} parent=5 // pred_check_branch
        %404 = sbr.rel (%p401) target = $region52
      $region51: #{tpu_custom_call.1} parent=5 // pred_region
        %s405 = ssub.s32 %s17, 1
        %s406 = smul.u32 8, %s29
        %p407 = scmp.lt.s32.totalorder %s27, 1
        %s408 = scalar_select %p407, %s27, 1
        %p409 = scmp.lt.s32.totalorder %s406, 7
        %s410 = scalar_select %p409, %s406, 7
        %s411 = smul.addr %s410, 2
        %s412 = smul.addr %s408, 16
        %s413 = sadd.s32 %s411, %s412
        %s414 = smul.addr %s413, 4
        %s415 = scalar_lea.vmem %s0, %s414
        %p416 = pneg %p64
        %p417 = pneg %p61
        %s418 = smul.u32 8, %s29
        %p419 = scmp.lt.s32.totalorder %s27, 1
        %s420 = scalar_select %p419, %s27, 1
        %p421 = scmp.lt.s32.totalorder %s418, 7
        %s422 = scalar_select %p421, %s418, 7
        %s423 = smul.addr %s420, 8
        %s424 = sadd.s32 %s422, %s423
        %s425 = smul.addr %s424, 4
        %s426 = scalar_lea.vmem %s1, %s425
        %p427 = pneg %p92
        %p428 = pneg %p89
        %s429 = smul.u32 8, %s29
        %p430 = scmp.lt.s32.totalorder %s27, 1
        %s431 = scalar_select %p430, %s27, 1
        %p432 = scmp.lt.s32.totalorder %s429, 7
        %s433 = scalar_select %p432, %s429, 7
        %s434 = smul.addr %s433, 2
        %s435 = smul.addr %s431, 16
        %s436 = sadd.s32 %s434, %s435
        %s437 = smul.addr %s436, 4
        %s438 = scalar_lea.vmem %s2, %s437
        %p439 = pneg %p120
        %p440 = pneg %p117
        %s441 = smul.u32 8, %s29
        %p442 = scmp.lt.s32.totalorder %s27, 1
        %s443 = scalar_select %p442, %s27, 1
        %p444 = scmp.lt.s32.totalorder %s441, 7
        %s445 = scalar_select %p444, %s441, 7
        %s446 = smul.addr %s443, 8
        %s447 = sadd.s32 %s445, %s446
        %s448 = smul.addr %s447, 4
        %s449 = scalar_lea.vmem %s3, %s448
        %p450 = pneg %p148
        %p451 = pneg %p145
        %s452 = smul.u32 8, %s29
        %p453 = scmp.lt.s32.totalorder %s27, 1
        %s454 = scalar_select %p453, %s27, 1
        %p455 = scmp.lt.s32.totalorder %s452, 7
        %s456 = scalar_select %p455, %s452, 7
        %s457 = smul.addr %s456, 2
        %s458 = smul.addr %s454, 16
        %s459 = sadd.s32 %s457, %s458
        %s460 = smul.addr %s459, 4
        %s461 = scalar_lea.vmem %s4, %s460
        %p462 = pneg %p176
        %p463 = pneg %p173
        %s464 = smul.u32 8, %s29
        %p465 = scmp.lt.s32.totalorder %s27, 1
        %s466 = scalar_select %p465, %s27, 1
        %p467 = scmp.lt.s32.totalorder %s464, 7
        %s468 = scalar_select %p467, %s464, 7
        %s469 = smul.addr %s466, 8
        %s470 = sadd.s32 %s468, %s469
        %s471 = smul.addr %s470, 4
        %s472 = scalar_lea.vmem %s5, %s471
        %p473 = pneg %p204
        %p474 = pneg %p201
        %p475 = scmp.lt.s32.totalorder %s28, 0
        %s476 = scalar_select %p475, %s28, 0
        %s477 = smul.addr %s476, 4
        %s478 = scalar_lea.vmem %s6, %s477
        %p479 = pneg %p230
        %p480 = pneg %p227
        %p481 = scmp.lt.s32.totalorder %s28, 0
        %s482 = scalar_select %p481, %s28, 0
        %s483 = scalar_lea.vmem %s7, %s482
        %p484 = pneg %p256
        %p485 = pneg %p253
        %p486 = pneg %p286
        %p487 = pneg %p283
        %s488 = sand.u32 %s273, 1
        %s489 = scalar_lea.sflag [#allocation3], %s488
        %s490 = sand.u32 %s273, 1
        %s491 = smul.addr %s490, 4
        %s492 = scalar_lea.vmem [#allocation2], %s491
        %s493 = smul.u32 8, %s29
        %p494 = scmp.lt.s32.totalorder %s27, 1
        %s495 = scalar_select %p494, %s27, 1
        %p496 = scmp.lt.s32.totalorder %s493, 7
        %s497 = scalar_select %p496, %s493, 7
        %s498 = smul.addr %s497, 2
        %s499 = smul.addr %s495, 16
        %s500 = sadd.s32 %s498, %s499
        %s501 = smul.addr %s500, 4
        %s502 = scalar_lea.vmem %s0, %s501
        %s503 = smul.u32 8, %s29
        %s504 = smul.u32 8, %s29
        %p505 = scmp.lt.s32.totalorder %s27, 1
        %s506 = scalar_select %p505, %s27, 1
        %p507 = scmp.lt.s32.totalorder %s504, 7
        %s508 = scalar_select %p507, %s504, 7
        %s509 = smul.addr %s506, 8
        %s510 = sadd.s32 %s508, %s509
        %s511 = smul.addr %s510, 4
        %s512 = scalar_lea.vmem %s1, %s511
        %s513 = smul.u32 8, %s29
        %s514 = smul.u32 8, %s29
        %p515 = scmp.lt.s32.totalorder %s27, 1
        %s516 = scalar_select %p515, %s27, 1
        %p517 = scmp.lt.s32.totalorder %s514, 7
        %s518 = scalar_select %p517, %s514, 7
        %s519 = smul.addr %s518, 2
        %s520 = smul.addr %s516, 16
        %s521 = sadd.s32 %s519, %s520
        %s522 = smul.addr %s521, 4
        %s523 = scalar_lea.vmem %s2, %s522
        %s524 = smul.u32 8, %s29
        %s525 = smul.u32 8, %s29
        %p526 = scmp.lt.s32.totalorder %s27, 1
        %s527 = scalar_select %p526, %s27, 1
        %p528 = scmp.lt.s32.totalorder %s525, 7
        %s529 = scalar_select %p528, %s525, 7
        %s530 = smul.addr %s527, 8
        %s531 = sadd.s32 %s529, %s530
        %s532 = smul.addr %s531, 4
        %s533 = scalar_lea.vmem %s3, %s532
        %s534 = smul.u32 8, %s29
        %s535 = smul.u32 8, %s29
        %p536 = scmp.lt.s32.totalorder %s27, 1
        %s537 = scalar_select %p536, %s27, 1
        %p538 = scmp.lt.s32.totalorder %s535, 7
        %s539 = scalar_select %p538, %s535, 7
        %s540 = smul.addr %s539, 2
        %s541 = smul.addr %s537, 16
        %s542 = sadd.s32 %s540, %s541
        %s543 = smul.addr %s542, 4
        %s544 = scalar_lea.vmem %s4, %s543
        %s545 = smul.u32 8, %s29
        %s546 = smul.u32 8, %s29
        %p547 = scmp.lt.s32.totalorder %s27, 1
        %s548 = scalar_select %p547, %s27, 1
        %p549 = scmp.lt.s32.totalorder %s546, 7
        %s550 = scalar_select %p549, %s546, 7
        %s551 = smul.addr %s548, 8
        %s552 = sadd.s32 %s550, %s551
        %s553 = smul.addr %s552, 4
        %s554 = scalar_lea.vmem %s5, %s553
        %s555 = smul.u32 8, %s29
        %p556 = scmp.lt.s32.totalorder %s28, 0
        %s557 = scalar_select %p556, %s28, 0
        %s558 = smul.addr %s557, 4
        %s559 = scalar_lea.vmem %s6, %s558
        %p560 = scmp.lt.s32.totalorder %s28, 0
        %s561 = scalar_select %p560, %s28, 0
        %s562 = scalar_lea.vmem %s7, %s561
        %v564 = vld [vmem:[%s502] sm:$0xf]
        %v565 = vld [vmem:[%s502 + $0x4] sm:$0x1]
        %v566 = vld [vmem:[%s502 + $0x8] sm:$0xf]
        %v567 = vld [vmem:[%s502 + $0xc] sm:$0x1]
        %v568 = vld [vmem:[%s502 + $0x10] sm:$0xf]
        %v569 = vld [vmem:[%s502 + $0x14] sm:$0x1]
        %v570 = vld [vmem:[%s502 + $0x18] sm:$0xf]
        %v571 = vld [vmem:[%s502 + $0x1c] sm:$0x1]
        %v572 = vld [vmem:[%s502 + $0x20] sm:$0xf]
        %v573 = vld [vmem:[%s502 + $0x24] sm:$0x1]
        %v574 = vld [vmem:[%s502 + $0x28] sm:$0xf]
        %v575 = vld [vmem:[%s502 + $0x2c] sm:$0x1]
        %v576 = vld [vmem:[%s502 + $0x30] sm:$0xf]
        %v577 = vld [vmem:[%s502 + $0x34] sm:$0x1]
        %v578 = vld [vmem:[%s502 + $0x38] sm:$0xf]
        %v579 = vld [vmem:[%s502 + $0x3c] sm:$0x1]
        %v580 = vld [vmem:[%s512] sm:$0xf]
        %v581 = vld [vmem:[%s512 + $0x4] sm:$0xf]
        %v582 = vld [vmem:[%s512 + $0x8] sm:$0xf]
        %v583 = vld [vmem:[%s512 + $0xc] sm:$0xf]
        %v584 = vld [vmem:[%s512 + $0x10] sm:$0xf]
        %v585 = vld [vmem:[%s512 + $0x14] sm:$0xf]
        %v586 = vld [vmem:[%s512 + $0x18] sm:$0xf]
        %v587 = vld [vmem:[%s512 + $0x1c] sm:$0xf]
        %v588 = vld [vmem:[%s523] sm:$0xf]
        %v589 = vld [vmem:[%s523 + $0x4] sm:$0x1]
        %v590 = vld [vmem:[%s523 + $0x8] sm:$0xf]
        %v591 = vld [vmem:[%s523 + $0xc] sm:$0x1]
        %v592 = vld [vmem:[%s523 + $0x10] sm:$0xf]
        %v593 = vld [vmem:[%s523 + $0x14] sm:$0x1]
        %v594 = vld [vmem:[%s523 + $0x18] sm:$0xf]
        %v595 = vld [vmem:[%s523 + $0x1c] sm:$0x1]
        %v596 = vld [vmem:[%s523 + $0x20] sm:$0xf]
        %v597 = vld [vmem:[%s523 + $0x24] sm:$0x1]
        %v598 = vld [vmem:[%s523 + $0x28] sm:$0xf]
        %v599 = vld [vmem:[%s523 + $0x2c] sm:$0x1]
        %v600 = vld [vmem:[%s523 + $0x30] sm:$0xf]
        %v601 = vld [vmem:[%s523 + $0x34] sm:$0x1]
        %v602 = vld [vmem:[%s523 + $0x38] sm:$0xf]
        %v603 = vld [vmem:[%s523 + $0x3c] sm:$0x1]
        %v604 = vld [vmem:[%s533] sm:$0xf]
        %v605 = vld [vmem:[%s533 + $0x4] sm:$0xf]
        %v606 = vld [vmem:[%s533 + $0x8] sm:$0xf]
        %v607 = vld [vmem:[%s533 + $0xc] sm:$0xf]
        %v608 = vld [vmem:[%s533 + $0x10] sm:$0xf]
        %v609 = vld [vmem:[%s533 + $0x14] sm:$0xf]
        %v610 = vld [vmem:[%s533 + $0x18] sm:$0xf]
        %v611 = vld [vmem:[%s533 + $0x1c] sm:$0xf]
        %v612 = vld [vmem:[%s544] sm:$0xf]
        %v613 = vld [vmem:[%s544 + $0x4] sm:$0x1]
        %v614 = vld [vmem:[%s544 + $0x8] sm:$0xf]
        %v615 = vld [vmem:[%s544 + $0xc] sm:$0x1]
        %v616 = vld [vmem:[%s544 + $0x10] sm:$0xf]
        %v617 = vld [vmem:[%s544 + $0x14] sm:$0x1]
        %v618 = vld [vmem:[%s544 + $0x18] sm:$0xf]
        %v619 = vld [vmem:[%s544 + $0x1c] sm:$0x1]
        %v620 = vld [vmem:[%s544 + $0x20] sm:$0xf]
        %v621 = vld [vmem:[%s544 + $0x24] sm:$0x1]
        %v622 = vld [vmem:[%s544 + $0x28] sm:$0xf]
        %v623 = vld [vmem:[%s544 + $0x2c] sm:$0x1]
        %v624 = vld [vmem:[%s544 + $0x30] sm:$0xf]
        %v625 = vld [vmem:[%s544 + $0x34] sm:$0x1]
        %v626 = vld [vmem:[%s544 + $0x38] sm:$0xf]
        %v627 = vld [vmem:[%s544 + $0x3c] sm:$0x1]
        %v628 = vld [vmem:[%s554] sm:$0xf]
        %v629 = vld [vmem:[%s554 + $0x4] sm:$0xf]
        %v630 = vld [vmem:[%s554 + $0x8] sm:$0xf]
        %v631 = vld [vmem:[%s554 + $0xc] sm:$0xf]
        %v632 = vld [vmem:[%s554 + $0x10] sm:$0xf]
        %v633 = vld [vmem:[%s554 + $0x14] sm:$0xf]
        %v634 = vld [vmem:[%s554 + $0x18] sm:$0xf]
        %v635 = vld [vmem:[%s554 + $0x1c] sm:$0xf]
        %v644 = vunpack.c.l.b16 %v580
        %v645 = vunpack.c.l.b16 %v581
        %v646 = vunpack.c.l.b16 %v582
        %v647 = vunpack.c.l.b16 %v583
        %v648 = vunpack.c.l.b16 %v584
        %v649 = vunpack.c.l.b16 %v585
        %v650 = vunpack.c.l.b16 %v586
        %v651 = vunpack.c.l.b16 %v587
        %v652 = vpack.c.b16 %v644, %v644
        %v653 = vpack.c.b16 %v645, %v645
        %v654 = vpack.c.b16 %v646, %v646
        %v655 = vpack.c.b16 %v647, %v647
        %v656 = vpack.c.b16 %v648, %v648
        %v657 = vpack.c.b16 %v649, %v649
        %v658 = vpack.c.b16 %v650, %v650
        %v659 = vpack.c.b16 %v651, %v651
        %660 = vrot.lane.b32.xlu0 %v652, 4
        %v661 = vpop.permute.xlu0 %660
        %662 = vrot.lane.b32.xlu0 %v653, 4
        %v663 = vpop.permute.xlu0 %662
        %664 = vrot.lane.b32.xlu0 %v654, 4
        %v665 = vpop.permute.xlu0 %664
        %666 = vrot.lane.b32.xlu0 %v655, 4
        %v667 = vpop.permute.xlu0 %666
        %668 = vrot.lane.b32.xlu0 %v656, 4
        %v669 = vpop.permute.xlu0 %668
        %670 = vrot.lane.b32.xlu0 %v657, 4
        %v671 = vpop.permute.xlu0 %670
        %672 = vrot.lane.b32.xlu0 %v658, 4
        %v673 = vpop.permute.xlu0 %672
        %674 = vrot.lane.b32.xlu0 %v659, 4
        %v675 = vpop.permute.xlu0 %674
        %v692 = vunpack.c.l.b16 %v564
        %v693 = vunpack.c.l.b16 %v565
        %v694 = vunpack.c.l.b16 %v566
        %v695 = vunpack.c.l.b16 %v567
        %v696 = vunpack.c.l.b16 %v568
        %v697 = vunpack.c.l.b16 %v569
        %v698 = vunpack.c.l.b16 %v570
        %v699 = vunpack.c.l.b16 %v571
        %v700 = vunpack.c.l.b16 %v572
        %v701 = vunpack.c.l.b16 %v573
        %v702 = vunpack.c.l.b16 %v574
        %v703 = vunpack.c.l.b16 %v575
        %v704 = vunpack.c.l.b16 %v576
        %v705 = vunpack.c.l.b16 %v577
        %v706 = vunpack.c.l.b16 %v578
        %v707 = vunpack.c.l.b16 %v579
        %v708 = vpack.c.b16 %v693, %v692
        %v709 = vpack.c.b16 %v695, %v694
        %v710 = vpack.c.b16 %v697, %v696
        %v711 = vpack.c.b16 %v699, %v698
        %v712 = vpack.c.b16 %v701, %v700
        %v713 = vpack.c.b16 %v703, %v702
        %v714 = vpack.c.b16 %v705, %v704
        %v715 = vpack.c.b16 %v707, %v706
        %v717 = vshrl.u32 %v708, 16
        %v719 = vshll.u32 %v708, 16
        %v721 = vrot.slane %v719, 1
        %v722 = vor.u32 %v717, %v721
        %v724 = vshrl.u32 %v709, 16
        %v726 = vshll.u32 %v709, 16
        %v728 = vrot.slane %v726, 1
        %v729 = vor.u32 %v724, %v728
        %v731 = vshrl.u32 %v710, 16
        %v733 = vshll.u32 %v710, 16
        %v735 = vrot.slane %v733, 1
        %v736 = vor.u32 %v731, %v735
        %v738 = vshrl.u32 %v711, 16
        %v740 = vshll.u32 %v711, 16
        %v742 = vrot.slane %v740, 1
        %v743 = vor.u32 %v738, %v742
        %v745 = vshrl.u32 %v712, 16
        %v747 = vshll.u32 %v712, 16
        %v749 = vrot.slane %v747, 1
        %v750 = vor.u32 %v745, %v749
        %v752 = vshrl.u32 %v713, 16
        %v754 = vshll.u32 %v713, 16
        %v756 = vrot.slane %v754, 1
        %v757 = vor.u32 %v752, %v756
        %v759 = vshrl.u32 %v714, 16
        %v761 = vshll.u32 %v714, 16
        %v763 = vrot.slane %v761, 1
        %v764 = vor.u32 %v759, %v763
        %v766 = vshrl.u32 %v715, 16
        %v768 = vshll.u32 %v715, 16
        %v770 = vrot.slane %v768, 1
        %v771 = vor.u32 %v766, %v770
        %772 = vrot.lane.b32.xlu0 %v722, 8
        %v773 = vpop.permute.xlu0 %772
        %774 = vrot.lane.b32.xlu0 %v729, 8
        %v775 = vpop.permute.xlu0 %774
        %776 = vrot.lane.b32.xlu0 %v736, 8
        %v777 = vpop.permute.xlu0 %776
        %778 = vrot.lane.b32.xlu0 %v743, 8
        %v779 = vpop.permute.xlu0 %778
        %780 = vrot.lane.b32.xlu0 %v750, 8
        %v781 = vpop.permute.xlu0 %780
        %782 = vrot.lane.b32.xlu0 %v757, 8
        %v783 = vpop.permute.xlu0 %782
        %784 = vrot.lane.b32.xlu0 %v764, 8
        %v785 = vpop.permute.xlu0 %784
        %786 = vrot.lane.b32.xlu0 %v771, 8
        %v787 = vpop.permute.xlu0 %786
        %v796 = vunpack.c.l.b16 %v588
        %v797 = vunpack.c.l.b16 %v590
        %v798 = vunpack.c.l.b16 %v592
        %v799 = vunpack.c.l.b16 %v594
        %v800 = vunpack.c.l.b16 %v596
        %v801 = vunpack.c.l.b16 %v598
        %v802 = vunpack.c.l.b16 %v600
        %v803 = vunpack.c.l.b16 %v602
        %v804 = vpack.c.b16 %v796, %v796
        %v805 = vpack.c.b16 %v797, %v797
        %v806 = vpack.c.b16 %v798, %v798
        %v807 = vpack.c.b16 %v799, %v799
        %v808 = vpack.c.b16 %v800, %v800
        %v809 = vpack.c.b16 %v801, %v801
        %v810 = vpack.c.b16 %v802, %v802
        %v811 = vpack.c.b16 %v803, %v803
        %812 = vrot.lane.b32.xlu0 %v804, 12
        %v813 = vpop.permute.xlu0 %812
        %814 = vrot.lane.b32.xlu0 %v805, 12
        %v815 = vpop.permute.xlu0 %814
        %816 = vrot.lane.b32.xlu0 %v806, 12
        %v817 = vpop.permute.xlu0 %816
        %818 = vrot.lane.b32.xlu0 %v807, 12
        %v819 = vpop.permute.xlu0 %818
        %820 = vrot.lane.b32.xlu0 %v808, 12
        %v821 = vpop.permute.xlu0 %820
        %822 = vrot.lane.b32.xlu0 %v809, 12
        %v823 = vpop.permute.xlu0 %822
        %824 = vrot.lane.b32.xlu0 %v810, 12
        %v825 = vpop.permute.xlu0 %824
        %826 = vrot.lane.b32.xlu0 %v811, 12
        %v827 = vpop.permute.xlu0 %826
        %v836 = vunpack.c.l.b16 %v604
        %v837 = vunpack.c.l.b16 %v605
        %v838 = vunpack.c.l.b16 %v606
        %v839 = vunpack.c.l.b16 %v607
        %v840 = vunpack.c.l.b16 %v608
        %v841 = vunpack.c.l.b16 %v609
        %v842 = vunpack.c.l.b16 %v610
        %v843 = vunpack.c.l.b16 %v611
        %v844 = vpack.c.b16 %v836, %v836
        %v845 = vpack.c.b16 %v837, %v837
        %v846 = vpack.c.b16 %v838, %v838
        %v847 = vpack.c.b16 %v839, %v839
        %v848 = vpack.c.b16 %v840, %v840
        %v849 = vpack.c.b16 %v841, %v841
        %v850 = vpack.c.b16 %v842, %v842
        %v851 = vpack.c.b16 %v843, %v843
        %852 = vrot.lane.b32.xlu0 %v844, 16
        %v853 = vpop.permute.xlu0 %852
        %854 = vrot.lane.b32.xlu0 %v845, 16
        %v855 = vpop.permute.xlu0 %854
        %856 = vrot.lane.b32.xlu0 %v846, 16
        %v857 = vpop.permute.xlu0 %856
        %858 = vrot.lane.b32.xlu0 %v847, 16
        %v859 = vpop.permute.xlu0 %858
        %860 = vrot.lane.b32.xlu0 %v848, 16
        %v861 = vpop.permute.xlu0 %860
        %862 = vrot.lane.b32.xlu0 %v849, 16
        %v863 = vpop.permute.xlu0 %862
        %864 = vrot.lane.b32.xlu0 %v850, 16
        %v865 = vpop.permute.xlu0 %864
        %866 = vrot.lane.b32.xlu0 %v851, 16
        %v867 = vpop.permute.xlu0 %866
        %v876 = vunpack.c.l.b16 %v589
        %v877 = vunpack.c.l.b16 %v591
        %v878 = vunpack.c.l.b16 %v593
        %v879 = vunpack.c.l.b16 %v595
        %v880 = vunpack.c.l.b16 %v597
        %v881 = vunpack.c.l.b16 %v599
        %v882 = vunpack.c.l.b16 %v601
        %v883 = vunpack.c.l.b16 %v603
        %v884 = vpack.c.b16 %v876, %v796
        %v885 = vpack.c.b16 %v877, %v797
        %v886 = vpack.c.b16 %v878, %v798
        %v887 = vpack.c.b16 %v879, %v799
        %v888 = vpack.c.b16 %v880, %v800
        %v889 = vpack.c.b16 %v881, %v801
        %v890 = vpack.c.b16 %v882, %v802
        %v891 = vpack.c.b16 %v883, %v803
        %v893 = vshrl.u32 %v884, 16
        %v895 = vshll.u32 %v884, 16
        %v897 = vrot.slane %v895, 1
        %v898 = vor.u32 %v893, %v897
        %v900 = vshrl.u32 %v885, 16
        %v902 = vshll.u32 %v885, 16
        %v904 = vrot.slane %v902, 1
        %v905 = vor.u32 %v900, %v904
        %v907 = vshrl.u32 %v886, 16
        %v909 = vshll.u32 %v886, 16
        %v911 = vrot.slane %v909, 1
        %v912 = vor.u32 %v907, %v911
        %v914 = vshrl.u32 %v887, 16
        %v916 = vshll.u32 %v887, 16
        %v918 = vrot.slane %v916, 1
        %v919 = vor.u32 %v914, %v918
        %v921 = vshrl.u32 %v888, 16
        %v923 = vshll.u32 %v888, 16
        %v925 = vrot.slane %v923, 1
        %v926 = vor.u32 %v921, %v925
        %v928 = vshrl.u32 %v889, 16
        %v930 = vshll.u32 %v889, 16
        %v932 = vrot.slane %v930, 1
        %v933 = vor.u32 %v928, %v932
        %v935 = vshrl.u32 %v890, 16
        %v937 = vshll.u32 %v890, 16
        %v939 = vrot.slane %v937, 1
        %v940 = vor.u32 %v935, %v939
        %v942 = vshrl.u32 %v891, 16
        %v944 = vshll.u32 %v891, 16
        %v946 = vrot.slane %v944, 1
        %v947 = vor.u32 %v942, %v946
        %948 = vrot.lane.b32.xlu0 %v898, 20
        %v949 = vpop.permute.xlu0 %948
        %950 = vrot.lane.b32.xlu0 %v905, 20
        %v951 = vpop.permute.xlu0 %950
        %952 = vrot.lane.b32.xlu0 %v912, 20
        %v953 = vpop.permute.xlu0 %952
        %954 = vrot.lane.b32.xlu0 %v919, 20
        %v955 = vpop.permute.xlu0 %954
        %956 = vrot.lane.b32.xlu0 %v926, 20
        %v957 = vpop.permute.xlu0 %956
        %958 = vrot.lane.b32.xlu0 %v933, 20
        %v959 = vpop.permute.xlu0 %958
        %960 = vrot.lane.b32.xlu0 %v940, 20
        %v961 = vpop.permute.xlu0 %960
        %962 = vrot.lane.b32.xlu0 %v947, 20
        %v963 = vpop.permute.xlu0 %962
        %v972 = vunpack.c.l.b16 %v612
        %v973 = vunpack.c.l.b16 %v614
        %v974 = vunpack.c.l.b16 %v616
        %v975 = vunpack.c.l.b16 %v618
        %v976 = vunpack.c.l.b16 %v620
        %v977 = vunpack.c.l.b16 %v622
        %v978 = vunpack.c.l.b16 %v624
        %v979 = vunpack.c.l.b16 %v626
        %v980 = vpack.c.b16 %v972, %v972
        %v981 = vpack.c.b16 %v973, %v973
        %v982 = vpack.c.b16 %v974, %v974
        %v983 = vpack.c.b16 %v975, %v975
        %v984 = vpack.c.b16 %v976, %v976
        %v985 = vpack.c.b16 %v977, %v977
        %v986 = vpack.c.b16 %v978, %v978
        %v987 = vpack.c.b16 %v979, %v979
        %988 = vrot.lane.b32.xlu0 %v980, 24
        %v989 = vpop.permute.xlu0 %988
        %990 = vrot.lane.b32.xlu0 %v981, 24
        %v991 = vpop.permute.xlu0 %990
        %992 = vrot.lane.b32.xlu0 %v982, 24
        %v993 = vpop.permute.xlu0 %992
        %994 = vrot.lane.b32.xlu0 %v983, 24
        %v995 = vpop.permute.xlu0 %994
        %996 = vrot.lane.b32.xlu0 %v984, 24
        %v997 = vpop.permute.xlu0 %996
        %998 = vrot.lane.b32.xlu0 %v985, 24
        %v999 = vpop.permute.xlu0 %998
        %1000 = vrot.lane.b32.xlu0 %v986, 24
        %v1001 = vpop.permute.xlu0 %1000
        %1002 = vrot.lane.b32.xlu0 %v987, 24
        %v1003 = vpop.permute.xlu0 %1002
        %v1012 = vunpack.c.l.b16 %v628
        %v1013 = vunpack.c.l.b16 %v629
        %v1014 = vunpack.c.l.b16 %v630
        %v1015 = vunpack.c.l.b16 %v631
        %v1016 = vunpack.c.l.b16 %v632
        %v1017 = vunpack.c.l.b16 %v633
        %v1018 = vunpack.c.l.b16 %v634
        %v1019 = vunpack.c.l.b16 %v635
        %v1020 = vpack.c.b16 %v1012, %v1012
        %v1021 = vpack.c.b16 %v1013, %v1013
        %v1022 = vpack.c.b16 %v1014, %v1014
        %v1023 = vpack.c.b16 %v1015, %v1015
        %v1024 = vpack.c.b16 %v1016, %v1016
        %v1025 = vpack.c.b16 %v1017, %v1017
        %v1026 = vpack.c.b16 %v1018, %v1018
        %v1027 = vpack.c.b16 %v1019, %v1019
        %1028 = vrot.lane.b32.xlu0 %v1020, 28
        %v1029 = vpop.permute.xlu0 %1028
        %1030 = vrot.lane.b32.xlu0 %v1021, 28
        %v1031 = vpop.permute.xlu0 %1030
        %1032 = vrot.lane.b32.xlu0 %v1022, 28
        %v1033 = vpop.permute.xlu0 %1032
        %1034 = vrot.lane.b32.xlu0 %v1023, 28
        %v1035 = vpop.permute.xlu0 %1034
        %1036 = vrot.lane.b32.xlu0 %v1024, 28
        %v1037 = vpop.permute.xlu0 %1036
        %1038 = vrot.lane.b32.xlu0 %v1025, 28
        %v1039 = vpop.permute.xlu0 %1038
        %1040 = vrot.lane.b32.xlu0 %v1026, 28
        %v1041 = vpop.permute.xlu0 %1040
        %1042 = vrot.lane.b32.xlu0 %v1027, 28
        %v1043 = vpop.permute.xlu0 %1042
        %v1052 = vunpack.c.l.b16 %v613
        %v1053 = vunpack.c.l.b16 %v615
        %v1054 = vunpack.c.l.b16 %v617
        %v1055 = vunpack.c.l.b16 %v619
        %v1056 = vunpack.c.l.b16 %v621
        %v1057 = vunpack.c.l.b16 %v623
        %v1058 = vunpack.c.l.b16 %v625
        %v1059 = vunpack.c.l.b16 %v627
        %v1060 = vpack.c.b16 %v1052, %v972
        %v1061 = vpack.c.b16 %v1053, %v973
        %v1062 = vpack.c.b16 %v1054, %v974
        %v1063 = vpack.c.b16 %v1055, %v975
        %v1064 = vpack.c.b16 %v1056, %v976
        %v1065 = vpack.c.b16 %v1057, %v977
        %v1066 = vpack.c.b16 %v1058, %v978
        %v1067 = vpack.c.b16 %v1059, %v979
        %v1069 = vshrl.u32 %v1060, 16
        %v1071 = vshll.u32 %v1060, 16
        %v1073 = vrot.slane %v1071, 1
        %v1074 = vor.u32 %v1069, %v1073
        %v1076 = vshrl.u32 %v1061, 16
        %v1078 = vshll.u32 %v1061, 16
        %v1080 = vrot.slane %v1078, 1
        %v1081 = vor.u32 %v1076, %v1080
        %v1083 = vshrl.u32 %v1062, 16
        %v1085 = vshll.u32 %v1062, 16
        %v1087 = vrot.slane %v1085, 1
        %v1088 = vor.u32 %v1083, %v1087
        %v1090 = vshrl.u32 %v1063, 16
        %v1092 = vshll.u32 %v1063, 16
        %v1094 = vrot.slane %v1092, 1
        %v1095 = vor.u32 %v1090, %v1094
        %v1097 = vshrl.u32 %v1064, 16
        %v1099 = vshll.u32 %v1064, 16
        %v1101 = vrot.slane %v1099, 1
        %v1102 = vor.u32 %v1097, %v1101
        %v1104 = vshrl.u32 %v1065, 16
        %v1106 = vshll.u32 %v1065, 16
        %v1108 = vrot.slane %v1106, 1
        %v1109 = vor.u32 %v1104, %v1108
        %v1111 = vshrl.u32 %v1066, 16
        %v1113 = vshll.u32 %v1066, 16
        %v1115 = vrot.slane %v1113, 1
        %v1116 = vor.u32 %v1111, %v1115
        %v1118 = vshrl.u32 %v1067, 16
        %v1120 = vshll.u32 %v1067, 16
        %v1122 = vrot.slane %v1120, 1
        %v1123 = vor.u32 %v1118, %v1122
        %1124 = vrot.lane.b32.xlu0 %v1074, 32
        %v1125 = vpop.permute.xlu0 %1124
        %1126 = vrot.lane.b32.xlu0 %v1081, 32
        %v1127 = vpop.permute.xlu0 %1126
        %1128 = vrot.lane.b32.xlu0 %v1088, 32
        %v1129 = vpop.permute.xlu0 %1128
        %1130 = vrot.lane.b32.xlu0 %v1095, 32
        %v1131 = vpop.permute.xlu0 %1130
        %1132 = vrot.lane.b32.xlu0 %v1102, 32
        %v1133 = vpop.permute.xlu0 %1132
        %1134 = vrot.lane.b32.xlu0 %v1109, 32
        %v1135 = vpop.permute.xlu0 %1134
        %1136 = vrot.lane.b32.xlu0 %v1116, 32
        %v1137 = vpop.permute.xlu0 %1136
        %1138 = vrot.lane.b32.xlu0 %v1123, 32
        %v1139 = vpop.permute.xlu0 %1138
        %vm1140 = vcmask 31744
        %v1143 = vsel %vm1140, %v564, %v661
        %v1146 = vsel %vm1140, %v566, %v663
        %v1149 = vsel %vm1140, %v568, %v665
        %v1152 = vsel %vm1140, %v570, %v667
        %v1155 = vsel %vm1140, %v572, %v669
        %v1158 = vsel %vm1140, %v574, %v671
        %v1161 = vsel %vm1140, %v576, %v673
        %v1164 = vsel %vm1140, %v578, %v675
        %vm1165 = vcmask 64512
        %v1167 = vsel %vm1165, %v1143, %v773
        %v1169 = vsel %vm1165, %v1146, %v775
        %v1171 = vsel %vm1165, %v1149, %v777
        %v1173 = vsel %vm1165, %v1152, %v779
        %v1175 = vsel %vm1165, %v1155, %v781
        %v1177 = vsel %vm1165, %v1158, %v783
        %v1179 = vsel %vm1165, %v1161, %v785
        %v1181 = vsel %vm1165, %v1164, %v787
        %vm1182 = vcmask 97280
        %v1184 = vsel %vm1182, %v1167, %v813
        %v1186 = vsel %vm1182, %v1169, %v815
        %v1188 = vsel %vm1182, %v1171, %v817
        %v1190 = vsel %vm1182, %v1173, %v819
        %v1192 = vsel %vm1182, %v1175, %v821
        %v1194 = vsel %vm1182, %v1177, %v823
        %v1196 = vsel %vm1182, %v1179, %v825
        %v1198 = vsel %vm1182, %v1181, %v827
        %vm1199 = vcmask 130048
        %v1201 = vsel %vm1199, %v1184, %v853
        %v1203 = vsel %vm1199, %v1186, %v855
        %v1205 = vsel %vm1199, %v1188, %v857
        %v1207 = vsel %vm1199, %v1190, %v859
        %v1209 = vsel %vm1199, %v1192, %v861
        %v1211 = vsel %vm1199, %v1194, %v863
        %v1213 = vsel %vm1199, %v1196, %v865
        %v1215 = vsel %vm1199, %v1198, %v867
        %vm1216 = vcmask 162816
        %v1218 = vsel %vm1216, %v1201, %v949
        %v1220 = vsel %vm1216, %v1203, %v951
        %v1222 = vsel %vm1216, %v1205, %v953
        %v1224 = vsel %vm1216, %v1207, %v955
        %v1226 = vsel %vm1216, %v1209, %v957
        %v1228 = vsel %vm1216, %v1211, %v959
        %v1230 = vsel %vm1216, %v1213, %v961
        %v1232 = vsel %vm1216, %v1215, %v963
        %vm1233 = vcmask 195584
        %v1235 = vsel %vm1233, %v1218, %v989
        %v1237 = vsel %vm1233, %v1220, %v991
        %v1239 = vsel %vm1233, %v1222, %v993
        %v1241 = vsel %vm1233, %v1224, %v995
        %v1243 = vsel %vm1233, %v1226, %v997
        %v1245 = vsel %vm1233, %v1228, %v999
        %v1247 = vsel %vm1233, %v1230, %v1001
        %v1249 = vsel %vm1233, %v1232, %v1003
        %vm1250 = vcmask 228352
        %v1252 = vsel %vm1250, %v1235, %v1029
        %v1254 = vsel %vm1250, %v1237, %v1031
        %v1256 = vsel %vm1250, %v1239, %v1033
        %v1258 = vsel %vm1250, %v1241, %v1035
        %v1260 = vsel %vm1250, %v1243, %v1037
        %v1262 = vsel %vm1250, %v1245, %v1039
        %v1264 = vsel %vm1250, %v1247, %v1041
        %v1266 = vsel %vm1250, %v1249, %v1043
        %vm1267 = vcmask 261120
        %v1269 = vsel %vm1267, %v1252, %v1125
        %v1271 = vsel %vm1267, %v1254, %v1127
        %v1273 = vsel %vm1267, %v1256, %v1129
        %v1275 = vsel %vm1267, %v1258, %v1131
        %v1277 = vsel %vm1267, %v1260, %v1133
        %v1279 = vsel %vm1267, %v1262, %v1135
        %v1281 = vsel %vm1267, %v1264, %v1137
        %v1283 = vsel %vm1267, %v1266, %v1139
        %v1284 = vld [vmem:[%s559] sm:$0xf]
        %v1285 = vld [vmem:[%s559 + $0x4] sm:$0xf]
        %v1286 = vld [vmem:[%s559 + $0x8] sm:$0xf]
        %v1287 = vld [vmem:[%s559 + $0xc] sm:$0xf]
        %v1288 = vld [vmem:[%s559 + $0x10] sm:$0x3]
        %v1289 = vld [vmem:[%s562] sm:$0x1]
        %v1291 = vlaneseq
        %v1292 = vshrl.u32 %v1291, 7
        %v1293 = vsub.s32 0, %v1292
        %v1294 = vrot.slane %v1289, %v1293
        %v1304 = vunpack.c.l.b16 %v1269
        %v1305 = vunpack.c.l.b16 %v1271
        %v1306 = vunpack.c.l.b16 %v1273
        %v1307 = vunpack.c.l.b16 %v1275
        %v1308 = vunpack.c.l.b16 %v1277
        %v1309 = vunpack.c.l.b16 %v1279
        %v1310 = vunpack.c.l.b16 %v1281
        %v1311 = vunpack.c.l.b16 %v1283
        %v1312 = vpack.c.b16 %v1305, %v1304
        %v1313 = vpack.c.b16 %v1307, %v1306
        %v1314 = vpack.c.b16 %v1309, %v1308
        %v1315 = vpack.c.b16 %v1311, %v1310
        %v1321 = vunpack.c.l.b16 %v1284
        %v1322 = vunpack.c.l.b16 %v1285
        %v1323 = vunpack.c.l.b16 %v1286
        %v1324 = vunpack.c.l.b16 %v1287
        %v1325 = vunpack.c.l.b16 %v1288
        %v1326 = vpack.c.b16 %v1322, %v1321
        %v1327 = vpack.c.b16 %v1324, %v1323
        %v1328 = vpack.c.b16 %v1325, %v1325
        %vm1331 = vcmask 293888
        %v1333 = vsel %vm1331, %v1312, 0
        %v1336 = vsel %vm1331, %v1313, 0
        %v1339 = vsel %vm1331, %v1314, 0
        %v1342 = vsel %vm1331, %v1315, 0
        %vm1344 = vcmask 1041408
        %v1346 = vsel %vm1344, %v1328, 0
        %1348 = vmatprep.subr.bf16.mxu0 0
        %1349 = vmatpush1.bf16.msra.mxu0 %v1326
        %1350 = vmatprep.subr.bf16.mxu0 0
        %1351 = vmatpush1.bf16.msra.mxu0 %v1327
        %1352 = vmatprep.subr.bf16.mxu0 0
        %1353 = vmatpush1.bf16.msra.mxu0 %v1346
        %1354 = vmatprep.subr.bf16.mxu0 0
        %1355 = vmatpush1.bf16.msra.mxu0 0
        %1356 = vmatprep.subr.bf16.mxu0 0
        %1357 = vmatpush1.bf16.msra.mxu0 0
        %1358 = vmatprep.subr.bf16.mxu0 0
        %1359 = vmatpush1.bf16.msra.mxu0 0
        %1360 = vmatprep.subr.bf16.mxu0 0
        %1361 = vmatpush1.bf16.msra.mxu0 0
        %1362 = vmatprep.subr.bf16.mxu0 0
        %1363 = vmatpush1.bf16.msra.mxu0 0
        %1364 = vmatprep.subr.bf16.mxu0 0
        %1365 = vmatpush1.bf16.msra.mxu0 0
        %1366 = vmatprep.subr.bf16.mxu0 0
        %1367 = vmatpush1.bf16.msra.mxu0 0
        %1368 = vmatprep.subr.bf16.mxu0 0
        %1369 = vmatpush1.bf16.msra.mxu0 0
        %1370 = vmatprep.subr.bf16.mxu0 0
        %1371 = vmatpush1.bf16.msra.mxu0 0
        %1372 = vmatprep.subr.bf16.mxu0 0
        %1373 = vmatpush1.bf16.msra.mxu0 0
        %1374 = vmatprep.subr.bf16.mxu0 0
        %1375 = vmatpush1.bf16.msra.mxu0 0
        %1376 = vmatprep.subr.bf16.mxu0 0
        %1377 = vmatpush1.bf16.msra.mxu0 0
        %1378 = vmatprep.subr.bf16.mxu0 0
        %1379 = vmatpush1.bf16.msra.mxu0 0
        %1380 = vmatprep.mubr.bf16.mxu0 0
        %1381 = vmatmul.mubr.bf16.gmra.mrb[0].mxu0 %v1333
        %v1382 = vpop.f32.mrb[0].mxu0
        %v1383 = vadd.f32 %v1294, %v1382
        %v1384 = vpop.f32.mrb[0].mxu0
        %v1385 = vpop.f32.mrb[0].mxu0
        %v1386 = vadd.f32 %v1294, %v1385
        %v1387 = vpop.f32.mrb[0].mxu0
        %1388 = vmatprep.mubr.bf16.mxu0 0
        %1389 = vmatmul.mubr.bf16.gmra.mrb[0].mxu0 %v1336
        %v1390 = vpop.f32.mrb[0].mxu0
        %v1391 = vadd.f32 %v1294, %v1390
        %v1392 = vpop.f32.mrb[0].mxu0
        %v1393 = vpop.f32.mrb[0].mxu0
        %v1394 = vadd.f32 %v1294, %v1393
        %v1395 = vpop.f32.mrb[0].mxu0
        %1396 = vmatprep.mubr.bf16.mxu0 0
        %1397 = vmatmul.mubr.bf16.gmra.mrb[0].mxu0 %v1339
        %v1398 = vpop.f32.mrb[0].mxu0
        %v1399 = vadd.f32 %v1294, %v1398
        %v1400 = vpop.f32.mrb[0].mxu0
        %v1401 = vpop.f32.mrb[0].mxu0
        %v1402 = vadd.f32 %v1294, %v1401
        %v1403 = vpop.f32.mrb[0].mxu0
        %1404 = vmatprep.mubr.bf16.mxu0 0
        %1405 = vmatmul.mubr.bf16.gmra.mrb[0].mxu0 %v1342
        %v1406 = vpop.f32.mrb[0].mxu0
        %v1407 = vadd.f32 %v1294, %v1406
        %v1408 = vpop.f32.mrb[0].mxu0
        %v1409 = vpop.f32.mrb[0].mxu0
        %v1410 = vadd.f32 %v1294, %v1409
        %v1411 = vpop.f32.mrb[0].mxu0
        %1412 = vdwg.mxu0
        %1413 = vxpose.xlu0.b32.start [1/16] %v1383, 128
        %1414 = vxpose.xlu0.b32.cont [2/16] %v1386, 128
        %1415 = vxpose.xlu0.b32.cont [3/16] %v1391, 128
        %1416 = vxpose.xlu0.b32.cont [4/16] %v1394, 128
        %1417 = vxpose.xlu0.b32.cont [5/16] %v1399, 128
        %1418 = vxpose.xlu0.b32.cont [6/16] %v1402, 128
        %1419 = vxpose.xlu0.b32.cont [7/16] %v1407, 128
        %1420 = vxpose.xlu0.b32.cont [8/16] %v1410, 128
        %1421 = vxpose.xlu0.b32.cont [9/16] 0.0, 128
        %1422 = vxpose.xlu0.b32.cont [10/16] 0.0, 128
        %1423 = vxpose.xlu0.b32.cont [11/16] 0.0, 128
        %1424 = vxpose.xlu0.b32.cont [12/16] 0.0, 128
        %1425 = vxpose.xlu0.b32.cont [13/16] 0.0, 128
        %1426 = vxpose.xlu0.b32.cont [14/16] 0.0, 128
        %1427 = vxpose.xlu0.b32.cont [15/16] 0.0, 128
        %1428 = vxpose.xlu0.b32.end [16/16] 0.0, 128
        %v1429 = vpop.trf.xlu0
        %v1430 = vpop.trf.xlu0
        %v1431 = vpop.trf.xlu0
        %v1432 = vpop.trf.xlu0
        %v1433 = vpop.trf.xlu0
        %v1434 = vpop.trf.xlu0
        %v1435 = vpop.trf.xlu0
        %v1436 = vpop.trf.xlu0
        %v1437 = vpop.trf.xlu0
        %v1438 = vpop.trf.xlu0
        %v1439 = vpop.trf.xlu0
        %v1440 = vpop.trf.xlu0
        %v1441 = vpop.trf.xlu0
        %v1442 = vpop.trf.xlu0
        %v1443 = vpop.trf.xlu0
        %v1444 = vpop.trf.xlu0
        %vm1445 = vcmask 519168
        %1446 = vst.msk [vmem:[%s492] sm:$0xf] %vm1445, %v1429
        %s1447 = sand.u32 %s273, 1
        %s1448 = scalar_lea.sflag [#allocation3], %s1447
        %s1449 = sand.u32 %s273, 1
        %s1450 = smul.addr %s1449, 4
        %s1451 = scalar_lea.vmem [#allocation2], %s1450
        // Predicated region
        $region53: #{tpu_custom_call.1} parent=51 // pred_check
          %p1452 = pneg %p283
        $region54: #{tpu_custom_call.1} parent=51 // pred_check_branch
          %1454 = sbr.rel (%p1452) target = $region56
        $region55: #{tpu_custom_call.1} parent=51 // pred_region
          %s1456 = ssub.s32 64, 64
          %1457 = vsyncadd %s1448, %s1456
          %s1458 = sadd.s32 %s29, %s28
          %s1459 = sadd.s32 %s1458, %s27
          %s1460 = smul.addr %s1459, 64
          %s1461 = scalar_lea.hbm %s8, %s1460
          %s1463 = sshll.u32 %s1451, 4
          %s1464 = int_to_ptr.vmem [resolvable:$true] %s1463
          %1466 = dma.vmem_to_hbm [thread:$0]  %s1464, 64, %s1461, %s1448
        $region56: #{tpu_custom_call.1} parent=51 // pred_fallthru
          _
      $region52: #{tpu_custom_call.1} parent=5 // pred_fallthru
        _
      %p1467 = scmp.le.s32.totalorder 2, %s17
      // Predicated region
      $region57: #{tpu_custom_call.1} parent=5 // pred_check
        %p1468 = pneg %p1467
      $region58: #{tpu_custom_call.1} parent=5 // pred_check_branch
        %1470 = sbr.rel (%p1468) target = $region60
      $region59: #{tpu_custom_call.1} parent=5 // pred_region
        %s1471 = ssub.s32 %s17, 2
        // Predicated region
        $region61: #{tpu_custom_call.1} parent=59 // pred_check
          %p1472 = pneg %p289
        $region62: #{tpu_custom_call.1} parent=59 // pred_check_branch
          %1474 = sbr.rel (%p1472) target = $region64
        $region63: #{tpu_custom_call.1} parent=59 // pred_region
          %s1475 = sand.u32 %s274, 1
          %s1476 = scalar_lea.sflag [#allocation3], %s1475
          %s1477 = sand.u32 %s274, 1
          %s1478 = smul.addr %s1477, 4
          %s1479 = scalar_lea.vmem [#allocation2], %s1478
          %1480 = dma.done %s1476, 64
        $region64: #{tpu_custom_call.1} parent=59 // pred_fallthru
          _
      $region60: #{tpu_custom_call.1} parent=5 // pred_fallthru
        _
    $region6: #{tpu_custom_call.1} parent=1 // loop_footer
      %s21 = sadd.s32 1, %s17
    $region7: #{tpu_custom_call.1} parent=1 // loop_footer_branch
      %16 = sbr.rel target = $region3
    $region8: #{tpu_custom_call.1} parent=1 // loop_exit
      _
    %1481 = vsyncpa [#allocation3], 1
    %s1482 = scalar_lea.sflag [#allocation3], 1
    %1483 = vsyncpa %s1482, 1

</llo_original>
